<compile_context>
chip_gen: v7x
topology: tpu7x:2x2x1
jax: 0.10.0
libtpu: 0.0.40
codegen_flags: <defaults>
</compile_context>

<pallas_src>
import functools

import numpy as np
import jax
import jax.numpy as jnp
from jax.experimental import pallas as pl
from jax.experimental.pallas import tpu as pltpu

_GELU_C1 = float(np.sqrt(2.0 / np.pi))
_GELU_C2 = float(np.sqrt(2.0 / np.pi) * 0.044715)


def _cdiv(a, b):
    return -(-a // b)


def ffn_kernel(gamma_ref, beta_ref, x_ref, w1_ref, b1_ref, w2_ref, b2_ref,
               o_ref, acc_ref, *, gelu_dtype):
    k = pl.program_id(1)

    @pl.when(k == 0)
    def _():
        acc_ref[...] = jnp.zeros_like(acc_ref)

    x = x_ref[...]                                               # (tm, H) f32

    # --- fc1 chunk: bf16 MXU matmul, f32 accumulate + f32 bias add ----------
    h = jnp.dot(x.astype(jnp.bfloat16), w1_ref[...],
                preferred_element_type=jnp.float32) + b1_ref[...]

    # --- tanh-approx GELU; bf16 on v6e/v7x (bf16 VPU/EUP), f32 on v5e -------
    h = h.astype(gelu_dtype)
    h2 = h * h
    inner = h * (_GELU_C1 + _GELU_C2 * h2)   # == sqrt(2/pi)*(h + 0.044715*h^3)
    h = h * (0.5 + 0.5 * jnp.tanh(inner))

    # --- fc2 chunk: bf16 MXU matmul, accumulate over 4H axis in f32 ---------
    acc_ref[...] += jnp.dot(h.astype(jnp.bfloat16), w2_ref[...],
                            preferred_element_type=jnp.float32)

    # --- epilogue on the last 4H chunk: bias + residual, then Norm ----------
    @pl.when(k == pl.num_programs(1) - 1)
    def _():
        y = acc_ref[...] + b2_ref[...] + x
        n = y.shape[-1]
        # Single-pass mean / unbiased variance (sum and sum-of-squares).
        s = jnp.sum(y, axis=-1, keepdims=True)
        ss = jnp.sum(y * y, axis=-1, keepdims=True)
        mu = s * (1.0 / n)
        var = (ss - s * mu) * (1.0 / (n - 1))            # torch.var default
        x_norm = (y - mu) * jax.lax.rsqrt(var + 1e-8)    # rsqrt -> EUP slot
        o_ref[...] = (gamma_ref[0] * x_norm + beta_ref[0]).astype(o_ref.dtype)


def _vmem_capacity_bytes():
    try:
        return int(pltpu.get_tpu_info().vmem_capacity_bytes)
    except Exception:
        return 64 * 1024 * 1024          # conservative (v7x-sized) fallback


def _gelu_dtype():
    try:
        kind = jax.devices()[0].device_kind.lower()
    except Exception:
        return jnp.float32
    # v6e / v7x have bf16 VPU+EUP; keep f32 on older generations (e.g. v5e).
    return jnp.bfloat16 if ("v6" in kind or "v7" in kind) else jnp.float32


def _choose_tm(rows):
    """Row tile: MXU-friendly size, minimal padding waste, >=2 tiles (v7x)."""
    if rows <= 8:
        return 8
    if rows < 128:
        tm = ((rows + 7) // 8) * 8                       # whole input, 8-aligned
    else:
        best_tm, best_key = None, None
        for cand in (512, 256, 128):                     # prefer larger on ties
            key = (_cdiv(rows, cand) * cand, -cand)      # (padded rows, -tile)
            if best_key is None or key < best_key:
                best_tm, best_key = cand, key
        tm = best_tm
    # v7x has 2 TensorCores: ensure the "parallel" row axis has >= 2 tiles.
    if _cdiv(rows, tm) < 2:
        tm = max(8, ((_cdiv(rows, 2) + 7) // 8) * 8)
    return tm


def _choose_tk(H, H4, tm, vmem_cap):
    """4H chunk per grid step; full 4H (resident weights) when it fits VMEM."""
    def fits(tk):
        w_bytes = 2 * 2 * (H * tk + tk * H)      # W1+W2 chunks, bf16, 2 buffers
        xo_bytes = 2 * 2 * tm * H * 4            # x + out tiles, 2 buffers, f32
        acc_bytes = tm * H * 4                   # f32 accumulator scratch
        mid_bytes = 3 * tm * tk * 4              # fc1/GELU intermediate + headroom
        bias_bytes = 2 * 4 * (tk + H)
        return (w_bytes + xo_bytes + acc_bytes + mid_bytes + bias_bytes
                ) <= int(0.8 * vmem_cap)

    tk = H4
    # Halve while over budget, keeping tk a multiple of 128 (lane-aligned).
    while not fits(tk) and tk % 2 == 0 and (tk // 2) % 128 == 0:
        tk //= 2
    return tk


def ffn_forward(x, w1, b1, w2, b2, gamma, beta, *, tm=None):
    """x: [B, S, H] float32.  w1: [H, 4H], b1: [4H], w2: [4H, H], b2: [H]."""
    B, S, H = x.shape
    H4 = w1.shape[1]
    rows = B * S

    vmem_cap = _vmem_capacity_bytes()
    if tm is None:
        tm = _choose_tm(rows)
    tm = min(tm, max(8, ((rows + 7) // 8) * 8))
    padded = _cdiv(rows, tm) * tm
    tk = _choose_tk(H, H4, tm, vmem_cap)

    # TODO(synk): if production H is not a multiple of 128, pad the hidden
    # axis (with masked Norm statistics) for lane-dense stores; H=384 is fine.
    x2 = x.reshape(rows, H)
    if padded != rows:
        x2 = jnp.pad(x2, ((0, padded - rows), (0, 0)))

    # Weights in bf16 (halves DMA + VMEM); biases stay f32 for the f32 adds.
    w1_bf = w1.astype(jnp.bfloat16)
    w2_bf = w2.astype(jnp.bfloat16)
    b1_2 = b1.reshape(1, H4).astype(jnp.float32)
    b2_2 = b2.reshape(1, H).astype(jnp.float32)

    vmem_limit = int(0.85 * vmem_cap)            # per-generation cap, ~85%

    kernel = functools.partial(ffn_kernel, gelu_dtype=_gelu_dtype())

    out2 = pl.pallas_call(
        kernel,
        out_shape=jax.ShapeDtypeStruct((padded, H), x.dtype),
        grid=(padded // tm, H4 // tk),
        in_specs=[
            pl.BlockSpec(memory_space=pltpu.MemorySpace.SMEM),   # gamma (1,)
            pl.BlockSpec(memory_space=pltpu.MemorySpace.SMEM),   # beta  (1,)
            pl.BlockSpec((tm, H), lambda i, k: (i, 0)),          # x row tile
            pl.BlockSpec((H, tk), lambda i, k: (0, k)),          # W1 chunk (bf16)
            pl.BlockSpec((1, tk), lambda i, k: (0, k)),          # b1 chunk
            pl.BlockSpec((tk, H), lambda i, k: (k, 0)),          # W2 chunk (bf16)
            pl.BlockSpec((1, H), lambda i, k: (0, 0)),           # b2
        ],
        out_specs=pl.BlockSpec((tm, H), lambda i, k: (i, 0)),
        scratch_shapes=[pltpu.VMEM((tm, H), jnp.float32)],       # f32 accumulator
        compiler_params=pltpu.CompilerParams(
            dimension_semantics=("parallel", "arbitrary"),
            vmem_limit_bytes=vmem_limit),
    )(gamma, beta, x2, w1_bf, b1_2, w2_bf, b2_2)

    return out2[:rows].reshape(B, S, H)


def ffn_reference(x, w1, b1, w2, b2, gamma, beta):
    """Pure-JAX f32 reference mirroring the PyTorch module."""
    h = x @ w1 + b1
    cdf = 0.5 * (1.0 + jnp.tanh(_GELU_C1 * (h + 0.044715 * h ** 3)))
    h = h * cdf
    y = h @ w2 + b2 + x
    mu = jnp.mean(y, axis=-1, keepdims=True)
    var = jnp.sum((y - mu) ** 2, axis=-1, keepdims=True) / (y.shape[-1] - 1)
    return gamma[0] * (y - mu) / jnp.sqrt(var + 1e-8) + beta[0]


def init_params(key, hidden_dim):
    """Deterministic synthetic init matching the module's parameter shapes."""
    h, h4 = hidden_dim, 4 * hidden_dim
    k1, k2, k3, k4 = jax.random.split(key, 4)
    # xavier_normal_ std = sqrt(2 / (fan_in + fan_out)); stored transposed [in, out]
    std1 = float(np.sqrt(2.0 / (h + h4)))
    std2 = float(np.sqrt(2.0 / (h4 + h)))
    w1 = jax.random.normal(k1, (h, h4), jnp.float32) * std1
    w2 = jax.random.normal(k2, (h4, h), jnp.float32) * std2
    # nn.Linear default bias init: U(-1/sqrt(fan_in), 1/sqrt(fan_in))
    b1 = jax.random.uniform(k3, (h4,), jnp.float32, -1.0 / np.sqrt(h), 1.0 / np.sqrt(h))
    b2 = jax.random.uniform(k4, (h,), jnp.float32, -1.0 / np.sqrt(h4), 1.0 / np.sqrt(h4))
    gamma = jnp.ones((1,), jnp.float32)   # Norm.gamma = 1.0
    beta = jnp.zeros((1,), jnp.float32)   # Norm.beta  = 0.0
    return w1, b1, w2, b2, gamma, beta


if __name__ == "__main__":
    B, S, H = 2, 8, 32        # small shapes: batch=2, seq=8, hidden=32 (4H=128)
    key = jax.random.PRNGKey(0)
    kx, kp = jax.random.split(key)
    x = jax.random.normal(kx, (B, S, H), jnp.float32)
    w1, b1, w2, b2, gamma, beta = init_params(kp, H)

    out = ffn_forward(x, w1, b1, w2, b2, gamma, beta)
    out = jax.block_until_ready(out)

    # bf16 matmul inputs -> compare at relaxed tolerance against the f32 ref.
    ref = ffn_reference(x, w1, b1, w2, b2, gamma, beta)
    np.testing.assert_allclose(np.asarray(out), np.asarray(ref), rtol=2e-2, atol=2e-2)

    print("KERNEL_OK")
</pallas_src>

<mosaic_0001>
module attributes {stable_mosaic.version = 11 : i64} {
  func.func @ffn_kernel(%arg0: i32, %arg1: i32, %arg2: memref<1xf32, #tpu.memory_space<smem>>, %arg3: memref<1xf32, #tpu.memory_space<smem>>, %arg4: memref<8x32xf32, #tpu.memory_space<vmem>>, %arg5: memref<32x128xbf16, #tpu.memory_space<vmem>>, %arg6: memref<1x128xf32, #tpu.memory_space<vmem>>, %arg7: memref<128x32xbf16, #tpu.memory_space<vmem>>, %arg8: memref<1x32xf32, #tpu.memory_space<vmem>>, %arg9: memref<8x32xf32, #tpu.memory_space<vmem>>, %arg10: memref<8x32xf32, #tpu.memory_space<vmem>>) attributes {dimension_semantics = [#tpu.dimension_semantics<parallel>, #tpu.dimension_semantics<arbitrary>], iteration_bounds = array<i64: 2, 1>, scalar_prefetch = 0 : i64, scratch_operands = 1 : i64, tpu.core_type = #tpu.core_type<tc>, window_params = [{transform_indices = @transform_0, window_bounds = array<i64: 1>}, {transform_indices = @transform_1, window_bounds = array<i64: 1>}, {transform_indices = @transform_2, window_bounds = array<i64: 8, 32>}, {transform_indices = @transform_3, window_bounds = array<i64: 32, 128>}, {transform_indices = @transform_4, window_bounds = array<i64: 1, 128>}, {transform_indices = @transform_5, window_bounds = array<i64: 128, 32>}, {pipeline_mode = #tpu.pipeline_mode<synchronous>, transform_indices = @transform_6, window_bounds = array<i64: 1, 32>}, {transform_indices = @transform_7, window_bounds = array<i64: 8, 32>}]} {
    %c0_i32 = arith.constant 0 : i32
    %0 = arith.cmpi eq, %arg1, %c0_i32 : i32
    %1 = arith.extui %0 : i1 to i32
    %c0_i32_0 = arith.constant 0 : i32
    %2 = arith.cmpi ne, %1, %c0_i32_0 : i32
    scf.if %2 {
      %cst_19 = arith.constant 0.000000e+00 : f32
      %31 = vector.broadcast %cst_19 : f32 to vector<8x32xf32>
      %c0_20 = arith.constant 0 : index
      %c0_21 = arith.constant 0 : index
      %32 = vector.load %arg10[%c0_20, %c0_21] : memref<8x32xf32, #tpu.memory_space<vmem>>, vector<8x32xf32>
      tpu.vector_store %arg10[%c0_20, %c0_21], %31 {strides = array<i32>} : memref<8x32xf32, #tpu.memory_space<vmem>>, vector<8x32xf32>,
    } else {
    }
    %c0 = arith.constant 0 : index
    %c0_1 = arith.constant 0 : index
    %3 = vector.load %arg4[%c0, %c0_1] : memref<8x32xf32, #tpu.memory_space<vmem>>, vector<8x32xf32>
    %4 = arith.truncf %3 : vector<8x32xf32> to vector<8x32xbf16>
    %c0_2 = arith.constant 0 : index
    %c0_3 = arith.constant 0 : index
    %5 = vector.load %arg5[%c0_2, %c0_3] : memref<32x128xbf16, #tpu.memory_space<vmem>>, vector<32x128xbf16>
    %cst = arith.constant dense<0.000000e+00> : vector<8x128xf32>
    %6 = tpu.matmul %4, %5, %cst {dimension_numbers = #tpu.dot_dimension_numbers<[1], [0], [0], [1], [0, 0, 1, 1], [], []>} : vector<8x32xbf16>, vector<32x128xbf16>, vector<8x128xf32> -> vector<8x128xf32>
    %c0_4 = arith.constant 0 : index
    %c0_5 = arith.constant 0 : index
    %7 = vector.load %arg6[%c0_4, %c0_5] : memref<1x128xf32, #tpu.memory_space<vmem>>, vector<1x128xf32>
    %8 = vector.broadcast %7 : vector<1x128xf32> to vector<8x128xf32>
    %9 = arith.addf %6, %8 : vector<8x128xf32>
    %10 = arith.mulf %9, %9 : vector<8x128xf32>
    %cst_6 = arith.constant 0.0356774069 : f32
    %11 = vector.broadcast %cst_6 : f32 to vector<8x128xf32>
    %12 = arith.mulf %11, %10 : vector<8x128xf32>
    %cst_7 = arith.constant 0.797884583 : f32
    %13 = vector.broadcast %cst_7 : f32 to vector<8x128xf32>
    %14 = arith.addf %13, %12 : vector<8x128xf32>
    %15 = arith.mulf %9, %14 : vector<8x128xf32>
    %16 = math.tanh %15 : vector<8x128xf32>
    %cst_8 = arith.constant 5.000000e-01 : f32
    %17 = vector.broadcast %cst_8 : f32 to vector<8x128xf32>
    %18 = arith.mulf %17, %16 : vector<8x128xf32>
    %cst_9 = arith.constant 5.000000e-01 : f32
    %19 = vector.broadcast %cst_9 : f32 to vector<8x128xf32>
    %20 = arith.addf %19, %18 : vector<8x128xf32>
    %21 = arith.mulf %9, %20 : vector<8x128xf32>
    %c0_10 = arith.constant 0 : index
    %c0_11 = arith.constant 0 : index
    %22 = vector.load %arg10[%c0_10, %c0_11] : memref<8x32xf32, #tpu.memory_space<vmem>>, vector<8x32xf32>
    %23 = arith.truncf %21 : vector<8x128xf32> to vector<8x128xbf16>
    %c0_12 = arith.constant 0 : index
    %c0_13 = arith.constant 0 : index
    %24 = vector.load %arg7[%c0_12, %c0_13] : memref<128x32xbf16, #tpu.memory_space<vmem>>, vector<128x32xbf16>
    %cst_14 = arith.constant dense<0.000000e+00> : vector<8x32xf32>
    %25 = tpu.matmul %23, %24, %cst_14 {dimension_numbers = #tpu.dot_dimension_numbers<[1], [0], [0], [1], [0, 0, 1, 1], [], []>} : vector<8x128xbf16>, vector<128x32xbf16>, vector<8x32xf32> -> vector<8x32xf32>
    %26 = arith.addf %22, %25 : vector<8x32xf32>
    %c0_15 = arith.constant 0 : index
    %c0_16 = arith.constant 0 : index
    %27 = vector.load %arg10[%c0_15, %c0_16] : memref<8x32xf32, #tpu.memory_space<vmem>>, vector<8x32xf32>
    tpu.vector_store %arg10[%c0_15, %c0_16], %26 {strides = array<i32>} : memref<8x32xf32, #tpu.memory_space<vmem>>, vector<8x32xf32>,
    %c0_i32_17 = arith.constant 0 : i32
    %28 = arith.cmpi eq, %arg1, %c0_i32_17 : i32
    %29 = arith.extui %28 : i1 to i32
    %c0_i32_18 = arith.constant 0 : i32
    %30 = arith.cmpi ne, %29, %c0_i32_18 : i32
    scf.if %30 {
      %c0_19 = arith.constant 0 : index
      %c0_20 = arith.constant 0 : index
      %31 = vector.load %arg10[%c0_19, %c0_20] : memref<8x32xf32, #tpu.memory_space<vmem>>, vector<8x32xf32>
      %c0_21 = arith.constant 0 : index
      %c0_22 = arith.constant 0 : index
      %32 = vector.load %arg8[%c0_21, %c0_22] : memref<1x32xf32, #tpu.memory_space<vmem>>, vector<1x32xf32>
      %33 = vector.broadcast %32 : vector<1x32xf32> to vector<8x32xf32>
      %34 = arith.addf %31, %33 : vector<8x32xf32>
      %35 = arith.addf %34, %3 : vector<8x32xf32>
      %cst_23 = arith.constant dense<0.000000e+00> : vector<8xf32>
      %36 = vector.multi_reduction <add>, %35, %cst_23 [1] : vector<8x32xf32> to vector<8xf32>
      %37 = vector.shape_cast %36 : vector<8xf32> to vector<8x1xf32>
      %38 = arith.mulf %35, %35 : vector<8x32xf32>
      %cst_24 = arith.constant dense<0.000000e+00> : vector<8xf32>
      %39 = vector.multi_reduction <add>, %38, %cst_24 [1] : vector<8x32xf32> to vector<8xf32>
      %40 = vector.shape_cast %39 : vector<8xf32> to vector<8x1xf32>
      %cst_25 = arith.constant 3.125000e-02 : f32
      %41 = vector.broadcast %cst_25 : f32 to vector<8x1xf32>
      %42 = arith.mulf %37, %41 : vector<8x1xf32>
      %43 = arith.mulf %37, %42 : vector<8x1xf32>
      %44 = arith.subf %40, %43 : vector<8x1xf32>
      %cst_26 = arith.constant 0.0322580636 : f32
      %45 = vector.broadcast %cst_26 : f32 to vector<8x1xf32>
      %46 = arith.mulf %44, %45 : vector<8x1xf32>
      %47 = vector.broadcast %42 : vector<8x1xf32> to vector<8x32xf32>
      %48 = arith.subf %35, %47 : vector<8x32xf32>
      %cst_27 = arith.constant 9.99999993E-9 : f32
      %49 = vector.broadcast %cst_27 : f32 to vector<8x1xf32>
      %50 = arith.addf %46, %49 : vector<8x1xf32>
      %51 = math.rsqrt %50 : vector<8x1xf32>
      %52 = vector.broadcast %51 : vector<8x1xf32> to vector<8x32xf32>
      %53 = arith.mulf %48, %52 : vector<8x32xf32>
      %c0_28 = arith.constant 0 : index
      %54 = memref.load %arg2[%c0_28] : memref<1xf32, #tpu.memory_space<smem>>
      %55 = vector.broadcast %54 : f32 to vector<8x32xf32>
      %56 = arith.mulf %55, %53 : vector<8x32xf32>
      %c0_29 = arith.constant 0 : index
      %57 = memref.load %arg3[%c0_29] : memref<1xf32, #tpu.memory_space<smem>>
      %58 = vector.broadcast %57 : f32 to vector<8x32xf32>
      %59 = arith.addf %56, %58 : vector<8x32xf32>
      %c0_30 = arith.constant 0 : index
      %c0_31 = arith.constant 0 : index
      %60 = vector.load %arg9[%c0_30, %c0_31] : memref<8x32xf32, #tpu.memory_space<vmem>>, vector<8x32xf32>
      tpu.vector_store %arg9[%c0_30, %c0_31], %59 {strides = array<i32>} : memref<8x32xf32, #tpu.memory_space<vmem>>, vector<8x32xf32>,
    } else {
    }
    return
  }
  func.func @transform_0(%arg0: i32, %arg1: i32) -> i32 {
    %c0_i32 = arith.constant 0 : i32
    %c0_i32_0 = arith.constant 0 : i32
    return %c0_i32 : i32
  }
  func.func @transform_1(%arg0: i32, %arg1: i32) -> i32 {
    %c0_i32 = arith.constant 0 : i32
    %c0_i32_0 = arith.constant 0 : i32
    return %c0_i32 : i32
  }
  func.func @transform_2(%arg0: i32, %arg1: i32) -> (i32, i32) {
    %c0_i32 = arith.constant 0 : i32
    %c0_i32_0 = arith.constant 0 : i32
    return %arg0, %c0_i32 : i32, i32
  }
  func.func @transform_3(%arg0: i32, %arg1: i32) -> (i32, i32) {
    %c0_i32 = arith.constant 0 : i32
    %c0_i32_0 = arith.constant 0 : i32
    return %c0_i32, %arg1 : i32, i32
  }
  func.func @transform_4(%arg0: i32, %arg1: i32) -> (i32, i32) {
    %c0_i32 = arith.constant 0 : i32
    %c0_i32_0 = arith.constant 0 : i32
    return %c0_i32, %arg1 : i32, i32
  }
  func.func @transform_5(%arg0: i32, %arg1: i32) -> (i32, i32) {
    %c0_i32 = arith.constant 0 : i32
    %c0_i32_0 = arith.constant 0 : i32
    return %arg1, %c0_i32 : i32, i32
  }
  func.func @transform_6(%arg0: i32, %arg1: i32) -> (i32, i32) {
    %c0_i32 = arith.constant 0 : i32
    %c0_i32_0 = arith.constant 0 : i32
    %c0_i32_1 = arith.constant 0 : i32
    return %c0_i32, %c0_i32_0 : i32, i32
  }
  func.func @transform_7(%arg0: i32, %arg1: i32) -> (i32, i32) {
    %c0_i32 = arith.constant 0 : i32
    %c0_i32_0 = arith.constant 0 : i32
    return %arg0, %c0_i32 : i32, i32
  }
}

</mosaic_0001>

<llo_original>
// kernel: tpu_custom_call.1
$region0: #{tpu_custom_call.1}
  #allocation0 [shape = 'u32[]', space=smem, size = 0x4, offset = 0x4, fixed_abs, tag = 'smem constant byte address 0x4 - core index']
  #allocation1 [shape = 'u32[144,128]{1,0:T(1,128)}', space=vmem, size = 0x12000, scoped, tag = 'internal scratch']
  #allocation2 [shape = 'f32[8,32]{1,0:T(8,128)}', space=vmem, size = 0x1000, scoped, tag = 'scratch operand']
  #allocation3 [shape = 'f32[1]{0:T(128)S(6)}', space=smem, size = 0x200, scoped, tag = 'scoped memory for tpu_custom_call.1']
  #allocation4 [shape = 'f32[1]{0:T(128)S(6)}', space=smem, size = 0x200, scoped, tag = 'scoped memory for tpu_custom_call.1']
  %s0 = inlined_call_operand.<no memory space> [shape: f32[1], index: 0, kind: input, shape index: {}]
  %s1 = inlined_call_operand.<no memory space> [shape: f32[1], index: 1, kind: input, shape index: {}]
  %s2 = inlined_call_operand.vmem [shape: f32[16,32], index: 2, kind: input, shape index: {}]
  %s3 = inlined_call_operand.vmem [shape: bf16[32,128], index: 3, kind: input, shape index: {}]
  %s4 = inlined_call_operand.vmem [shape: f32[1,128], index: 4, kind: input, shape index: {}]
  %s5 = inlined_call_operand.vmem [shape: bf16[128,32], index: 5, kind: input, shape index: {}]
  %s6 = inlined_call_operand.vmem [shape: f32[1,32], index: 6, kind: input, shape index: {}]
  %s7 = inlined_call_operand.hbm [shape: f32[16,32], index: 7, kind: output, shape index: {}]
  %s8 = sld [smem:[#allocation0]]
  $region69: #{tpu_custom_call.1} parent=0
    _
  %s10 = ssub.s32 1, %s8
  %s11 = scalar_select 0, %s10, %s8
  %12 = sst [smem:[#allocation3]] %s0
  %13 = sst [smem:[#allocation4]] %s1
  $region1: #{tpu_custom_call.1} parent=0
    #allocation5 [shape = 'u8[8192]{0}', space=vmem, size = 0x2000, scoped, tag = 'output window, operand 0']
    #allocation6 [shape = 's32[2]{0}', space=sflag, size = 0x8, scoped, tag = 'scoped memory for tpu_custom_call.1']
    %14 = vsyncpa [#allocation6], 0
    %s15 = scalar_lea.sflag [#allocation6], 1
    %16 = vsyncpa %s15, 0
    loop: start=0, step=1, limit=4
    $region2: #{tpu_custom_call.1} parent=1 // loop_pre_header
      _
    $region3: #{tpu_custom_call.1} parent=1 // loop_header
      %s18 = sphi 0, %s22
      %p19 = scmp.ge.s32.totalorder %s18, 4
      %s25 = sphi 0, %s37
      %s26 = sphi 0, %s33
      %s27 = sphi 0, %s25
      %s28 = sphi 0, %s26
      %s29 = sphi 0, %s27
      %s30 = sphi 0, %s28
      %s38 = sphi 0, %s38
      %s40 = sphi 0, %s38
      %s41 = sphi 0, %s40
      %s55 = sphi 0, %s41
      %s59 = sphi 0, %s59
      %s61 = sphi 0, %s59
      %s62 = sphi 0, %s61
      %s76 = sphi 0, %s62
      %s82 = sphi 0, %s84
      %s85 = sphi 0, %s82
      %s86 = sphi 0, %s85
      %s102 = sphi 0, %s86
      %s108 = sphi 0, %s110
      %s111 = sphi 0, %s108
      %s112 = sphi 0, %s111
      %s128 = sphi 0, %s112
      %s134 = sphi 0, %s136
      %s137 = sphi 0, %s134
      %s138 = sphi 0, %s137
      %s154 = sphi 0, %s138
      %s160 = sphi 0, %s162
      %s163 = sphi 0, %s160
      %s164 = sphi 0, %s163
      %s180 = sphi 0, %s164
      %s184 = sphi 0, %s184
      %s186 = sphi 0, %s184
      %s187 = sphi 0, %s186
      %s201 = sphi 0, %s187
      %s207 = sphi 0, %s209
      %s210 = sphi 0, %s207
      %s211 = sphi 0, %s210
      %s227 = sphi 0, %s211
    $region4: #{tpu_custom_call.1} parent=1 // loop_header_branch
      %21 = sbr.rel (%p19) target = $region8
    $region5: #{tpu_custom_call.1} parent=1 // loop_body
      %s23 = ssub.s32 %s18, 1
      %s24 = ssub.s32 %s18, 2
      %s31 = sadd.s32 1, %s26
      %p32 = scmp.ge.s32.totalorder %s31, 1
      %s33 = scalar_select %p32, 0, %s31
      %s34 = sadd.s32 1, %s25
      %s35 = scalar_select %p32, %s34, %s25
      %p36 = scmp.ge.s32.totalorder %s35, 2
      %s37 = scalar_select %p36, 0, %s35
      %s39 = sadd.s32 %s38, 1
      %p42 = scmp.eq.s32.totalorder %s18, 1
      %p43 = scmp.ne.s32.totalorder %s38, %s40
      %p44 = scmp.eq.s32.totalorder %s18, 0
      %p45 = por %p43, %p44
      %p46 = scmp.ne.s32.totalorder %s38, %s40
      %p47 = scmp.eq.s32.totalorder %s23, 1
      %p48 = por %p46, %p47
      %p49 = scmp.ne.s32.totalorder %s40, %s41
      %p50 = scmp.eq.s32.totalorder %s23, 0
      %p51 = por %p49, %p50
      %p52 = scmp.ne.s32.totalorder %s40, %s41
      %p53 = scmp.eq.s32.totalorder %s24, 1
      %p54 = por %p52, %p53
      %p56 = scmp.ne.s32.totalorder %s41, %s55
      %p57 = scmp.eq.s32.totalorder %s24, 0
      %p58 = por %p56, %p57
      %s60 = sadd.s32 %s59, 1
      %p63 = scmp.eq.s32.totalorder %s18, 1
      %p64 = scmp.ne.s32.totalorder %s59, %s61
      %p65 = scmp.eq.s32.totalorder %s18, 0
      %p66 = por %p64, %p65
      %p67 = scmp.ne.s32.totalorder %s59, %s61
      %p68 = scmp.eq.s32.totalorder %s23, 1
      %p69 = por %p67, %p68
      %p70 = scmp.ne.s32.totalorder %s61, %s62
      %p71 = scmp.eq.s32.totalorder %s23, 0
      %p72 = por %p70, %p71
      %p73 = scmp.ne.s32.totalorder %s61, %s62
      %p74 = scmp.eq.s32.totalorder %s24, 1
      %p75 = por %p73, %p74
      %p77 = scmp.ne.s32.totalorder %s62, %s76
      %p78 = scmp.eq.s32.totalorder %s24, 0
      %p79 = por %p77, %p78
      %s80 = ssub.s32 %s25, %s37
      %p81 = scmp.eq.s32.totalorder %s80, 0
      %s83 = sadd.s32 %s82, 1
      %s84 = scalar_select %p81, %s82, %s83
      %p87 = pneg %p81
      %p88 = scmp.eq.s32.totalorder %s18, 1
      %p89 = por %p87, %p88
      %p90 = scmp.ne.s32.totalorder %s82, %s85
      %p91 = scmp.eq.s32.totalorder %s18, 0
      %p92 = por %p90, %p91
      %p93 = scmp.ne.s32.totalorder %s82, %s85
      %p94 = scmp.eq.s32.totalorder %s23, 1
      %p95 = por %p93, %p94
      %p96 = scmp.ne.s32.totalorder %s85, %s86
      %p97 = scmp.eq.s32.totalorder %s23, 0
      %p98 = por %p96, %p97
      %p99 = scmp.ne.s32.totalorder %s85, %s86
      %p100 = scmp.eq.s32.totalorder %s24, 1
      %p101 = por %p99, %p100
      %p103 = scmp.ne.s32.totalorder %s86, %s102
      %p104 = scmp.eq.s32.totalorder %s24, 0
      %p105 = por %p103, %p104
      %s106 = ssub.s32 %s26, %s33
      %p107 = scmp.eq.s32.totalorder %s106, 0
      %s109 = sadd.s32 %s108, 1
      %s110 = scalar_select %p107, %s108, %s109
      %p113 = pneg %p107
      %p114 = scmp.eq.s32.totalorder %s18, 1
      %p115 = por %p113, %p114
      %p116 = scmp.ne.s32.totalorder %s108, %s111
      %p117 = scmp.eq.s32.totalorder %s18, 0
      %p118 = por %p116, %p117
      %p119 = scmp.ne.s32.totalorder %s108, %s111
      %p120 = scmp.eq.s32.totalorder %s23, 1
      %p121 = por %p119, %p120
      %p122 = scmp.ne.s32.totalorder %s111, %s112
      %p123 = scmp.eq.s32.totalorder %s23, 0
      %p124 = por %p122, %p123
      %p125 = scmp.ne.s32.totalorder %s111, %s112
      %p126 = scmp.eq.s32.totalorder %s24, 1
      %p127 = por %p125, %p126
      %p129 = scmp.ne.s32.totalorder %s112, %s128
      %p130 = scmp.eq.s32.totalorder %s24, 0
      %p131 = por %p129, %p130
      %s132 = ssub.s32 %s26, %s33
      %p133 = scmp.eq.s32.totalorder %s132, 0
      %s135 = sadd.s32 %s134, 1
      %s136 = scalar_select %p133, %s134, %s135
      %p139 = pneg %p133
      %p140 = scmp.eq.s32.totalorder %s18, 1
      %p141 = por %p139, %p140
      %p142 = scmp.ne.s32.totalorder %s134, %s137
      %p143 = scmp.eq.s32.totalorder %s18, 0
      %p144 = por %p142, %p143
      %p145 = scmp.ne.s32.totalorder %s134, %s137
      %p146 = scmp.eq.s32.totalorder %s23, 1
      %p147 = por %p145, %p146
      %p148 = scmp.ne.s32.totalorder %s137, %s138
      %p149 = scmp.eq.s32.totalorder %s23, 0
      %p150 = por %p148, %p149
      %p151 = scmp.ne.s32.totalorder %s137, %s138
      %p152 = scmp.eq.s32.totalorder %s24, 1
      %p153 = por %p151, %p152
      %p155 = scmp.ne.s32.totalorder %s138, %s154
      %p156 = scmp.eq.s32.totalorder %s24, 0
      %p157 = por %p155, %p156
      %s158 = ssub.s32 %s26, %s33
      %p159 = scmp.eq.s32.totalorder %s158, 0
      %s161 = sadd.s32 %s160, 1
      %s162 = scalar_select %p159, %s160, %s161
      %p165 = pneg %p159
      %p166 = scmp.eq.s32.totalorder %s18, 1
      %p167 = por %p165, %p166
      %p168 = scmp.ne.s32.totalorder %s160, %s163
      %p169 = scmp.eq.s32.totalorder %s18, 0
      %p170 = por %p168, %p169
      %p171 = scmp.ne.s32.totalorder %s160, %s163
      %p172 = scmp.eq.s32.totalorder %s23, 1
      %p173 = por %p171, %p172
      %p174 = scmp.ne.s32.totalorder %s163, %s164
      %p175 = scmp.eq.s32.totalorder %s23, 0
      %p176 = por %p174, %p175
      %p177 = scmp.ne.s32.totalorder %s163, %s164
      %p178 = scmp.eq.s32.totalorder %s24, 1
      %p179 = por %p177, %p178
      %p181 = scmp.ne.s32.totalorder %s164, %s180
      %p182 = scmp.eq.s32.totalorder %s24, 0
      %p183 = por %p181, %p182
      %s185 = sadd.s32 %s184, 1
      %p188 = scmp.eq.s32.totalorder %s18, 1
      %p189 = scmp.ne.s32.totalorder %s184, %s186
      %p190 = scmp.eq.s32.totalorder %s18, 0
      %p191 = por %p189, %p190
      %p192 = scmp.ne.s32.totalorder %s184, %s186
      %p193 = scmp.eq.s32.totalorder %s23, 1
      %p194 = por %p192, %p193
      %p195 = scmp.ne.s32.totalorder %s186, %s187
      %p196 = scmp.eq.s32.totalorder %s23, 0
      %p197 = por %p195, %p196
      %p198 = scmp.ne.s32.totalorder %s186, %s187
      %p199 = scmp.eq.s32.totalorder %s24, 1
      %p200 = por %p198, %p199
      %p202 = scmp.ne.s32.totalorder %s187, %s201
      %p203 = scmp.eq.s32.totalorder %s24, 0
      %p204 = por %p202, %p203
      %s205 = ssub.s32 %s25, %s37
      %p206 = scmp.eq.s32.totalorder %s205, 0
      %s208 = sadd.s32 %s207, 1
      %s209 = scalar_select %p206, %s207, %s208
      %p212 = pneg %p206
      %p213 = scmp.eq.s32.totalorder %s18, 1
      %p214 = por %p212, %p213
      %p215 = scmp.ne.s32.totalorder %s207, %s210
      %p216 = scmp.eq.s32.totalorder %s18, 0
      %p217 = por %p215, %p216
      %p218 = scmp.ne.s32.totalorder %s207, %s210
      %p219 = scmp.eq.s32.totalorder %s23, 1
      %p220 = por %p218, %p219
      %p221 = scmp.ne.s32.totalorder %s210, %s211
      %p222 = scmp.eq.s32.totalorder %s23, 0
      %p223 = por %p221, %p222
      %p224 = scmp.ne.s32.totalorder %s210, %s211
      %p225 = scmp.eq.s32.totalorder %s24, 1
      %p226 = por %p224, %p225
      %p228 = scmp.ne.s32.totalorder %s211, %s227
      %p229 = scmp.eq.s32.totalorder %s24, 0
      %p230 = por %p228, %p229
      %p231 = scmp.le.s32.totalorder 1, %s18
      %p232 = scmp.lt.s32.totalorder %s18, 3
      %p233 = pnand %p231, %p232
      %p234 = pneg %p233
      // Predicated region
      $region9: #{tpu_custom_call.1} parent=5 // pred_check
        _
      $region10: #{tpu_custom_call.1} parent=5 // pred_check_branch
        %236 = sbr.rel (%p233) target = $region12
      $region11: #{tpu_custom_call.1} parent=5 // pred_region
        %s237 = ssub.s32 %s18, 1
        // Predicated region
        $region13: #{tpu_custom_call.1} parent=11 // pred_check
          %p238 = pneg %p51
        $region14: #{tpu_custom_call.1} parent=11 // pred_check_branch
          %240 = sbr.rel (%p238) target = $region16
        $region15: #{tpu_custom_call.1} parent=11 // pred_region
          _
        $region16: #{tpu_custom_call.1} parent=11 // pred_fallthru
          _
        // Predicated region
        $region17: #{tpu_custom_call.1} parent=11 // pred_check
          %p241 = pneg %p72
        $region18: #{tpu_custom_call.1} parent=11 // pred_check_branch
          %243 = sbr.rel (%p241) target = $region20
        $region19: #{tpu_custom_call.1} parent=11 // pred_region
          _
        $region20: #{tpu_custom_call.1} parent=11 // pred_fallthru
          _
        // Predicated region
        $region21: #{tpu_custom_call.1} parent=11 // pred_check
          %p244 = pneg %p124
        $region22: #{tpu_custom_call.1} parent=11 // pred_check_branch
          %246 = sbr.rel (%p244) target = $region24
        $region23: #{tpu_custom_call.1} parent=11 // pred_region
          %p247 = scmp.lt.s32.totalorder %s28, 0
          %s248 = scalar_select %p247, %s28, 0
          %s249 = smul.addr %s248, 4
          %s250 = scalar_lea.vmem %s3, %s249
        $region24: #{tpu_custom_call.1} parent=11 // pred_fallthru
          _
        // Predicated region
        $region25: #{tpu_custom_call.1} parent=11 // pred_check
          %p251 = pneg %p150
        $region26: #{tpu_custom_call.1} parent=11 // pred_check_branch
          %253 = sbr.rel (%p251) target = $region28
        $region27: #{tpu_custom_call.1} parent=11 // pred_region
          %p254 = scmp.lt.s32.totalorder %s28, 0
          %s255 = scalar_select %p254, %s28, 0
          %s256 = scalar_lea.vmem %s4, %s255
        $region28: #{tpu_custom_call.1} parent=11 // pred_fallthru
          _
        // Predicated region
        $region29: #{tpu_custom_call.1} parent=11 // pred_check
          %p257 = pneg %p176
        $region30: #{tpu_custom_call.1} parent=11 // pred_check_branch
          %259 = sbr.rel (%p257) target = $region32
        $region31: #{tpu_custom_call.1} parent=11 // pred_region
          %s260 = smul.u32 16, %s28
          %p261 = scmp.lt.s32.totalorder %s260, 15
          %s262 = scalar_select %p261, %s260, 15
          %s263 = smul.addr %s262, 4
          %s264 = scalar_lea.vmem %s5, %s263
          %s265 = smul.u32 16, %s28
        $region32: #{tpu_custom_call.1} parent=11 // pred_fallthru
          _
        // Predicated region
        $region33: #{tpu_custom_call.1} parent=11 // pred_check
          %p266 = pneg %p197
        $region34: #{tpu_custom_call.1} parent=11 // pred_check_branch
          %268 = sbr.rel (%p266) target = $region36
        $region35: #{tpu_custom_call.1} parent=11 // pred_region
          _
        $region36: #{tpu_custom_call.1} parent=11 // pred_fallthru
          _
      $region12: #{tpu_custom_call.1} parent=5 // pred_fallthru
        _
      %p269 = scmp.lt.s32.totalorder %s18, 2
      // Predicated region
      $region37: #{tpu_custom_call.1} parent=5 // pred_check
        %p270 = pneg %p269
      $region38: #{tpu_custom_call.1} parent=5 // pred_check_branch
        %272 = sbr.rel (%p270) target = $region40
      $region39: #{tpu_custom_call.1} parent=5 // pred_region
        // Predicated region
        $region41: #{tpu_custom_call.1} parent=39 // pred_check
          %p273 = pneg %p92
        $region42: #{tpu_custom_call.1} parent=39 // pred_check_branch
          %275 = sbr.rel (%p273) target = $region44
        $region43: #{tpu_custom_call.1} parent=39 // pred_region
          %p276 = scmp.lt.s32.totalorder %s25, 1
          %s277 = scalar_select %p276, %s25, 1
          %s278 = smul.addr %s277, 8
          %s279 = scalar_lea.vmem %s2, %s278
        $region44: #{tpu_custom_call.1} parent=39 // pred_fallthru
          _
      $region40: #{tpu_custom_call.1} parent=5 // pred_fallthru
        _
      %p280 = scmp.le.s32.totalorder 1, %s18
      %p281 = scmp.lt.s32.totalorder %s18, 3
      %p282 = pnand %p280, %p281
      %p283 = pneg %p282
      // Predicated region
      $region45: #{tpu_custom_call.1} parent=5 // pred_check
        _
      $region46: #{tpu_custom_call.1} parent=5 // pred_check_branch
        %285 = sbr.rel (%p282) target = $region48
      $region47: #{tpu_custom_call.1} parent=5 // pred_region
        %s286 = ssub.s32 %s18, 1
        %p287 = pneg %p51
        %p288 = pneg %p48
        %p289 = pneg %p72
        %p290 = pneg %p69
        %p291 = scmp.lt.s32.totalorder %s27, 1
        %s292 = scalar_select %p291, %s27, 1
        %s293 = smul.addr %s292, 8
        %s294 = scalar_lea.vmem %s2, %s293
        %p295 = pneg %p98
        %p296 = pneg %p95
        %p297 = scmp.lt.s32.totalorder %s28, 0
        %s298 = scalar_select %p297, %s28, 0
        %s299 = smul.addr %s298, 4
        %s300 = scalar_lea.vmem %s3, %s299
        %p301 = pneg %p124
        %p302 = pneg %p121
        %p303 = scmp.lt.s32.totalorder %s28, 0
        %s304 = scalar_select %p303, %s28, 0
        %s305 = scalar_lea.vmem %s4, %s304
        %p306 = pneg %p150
        %p307 = pneg %p147
        %s308 = smul.u32 16, %s28
        %p309 = scmp.lt.s32.totalorder %s308, 15
        %s310 = scalar_select %p309, %s308, 15
        %s311 = smul.addr %s310, 4
        %s312 = scalar_lea.vmem %s5, %s311
        %p313 = pneg %p176
        %p314 = pneg %p173
        %p315 = pneg %p197
        %p316 = pneg %p194
        %p317 = pneg %p223
        %p318 = pneg %p220
        %s319 = sand.u32 %s210, 1
        %s320 = scalar_lea.sflag [#allocation6], %s319
        %s321 = sand.u32 %s210, 1
        %s322 = smul.addr %s321, 8
        %s323 = scalar_lea.vmem [#allocation5], %s322
        %p324 = scmp.lt.s32.totalorder %s27, 1
        %s325 = scalar_select %p324, %s27, 1
        %s326 = smul.addr %s325, 8
        %s327 = scalar_lea.vmem %s2, %s326
        %p328 = scmp.lt.s32.totalorder %s28, 0
        %s329 = scalar_select %p328, %s28, 0
        %s330 = smul.addr %s329, 4
        %s331 = scalar_lea.vmem %s3, %s330
        %p332 = scmp.lt.s32.totalorder %s28, 0
        %s333 = scalar_select %p332, %s28, 0
        %s334 = scalar_lea.vmem %s4, %s333
        %s335 = smul.u32 16, %s28
        %p336 = scmp.lt.s32.totalorder %s335, 15
        %s337 = scalar_select %p336, %s335, 15
        %s338 = smul.addr %s337, 4
        %s339 = scalar_lea.vmem %s5, %s338
        %s340 = smul.u32 16, %s28
        %p342 = scmp.eq.s32.totalorder %s28, 0
        // Predicated region
        $region49: #{tpu_custom_call.1} parent=47 // pred_check
          %p343 = pneg %p342
        $region50: #{tpu_custom_call.1} parent=47 // pred_check_branch
          %345 = sbr.rel (%p343) target = $region52
        $region51: #{tpu_custom_call.1} parent=47 // pred_region
          %vm346 = vcmask 261120
          %347 = vst.msk [vmem:[#allocation2] sm:$0xff] %vm346, 0.0
        $region52: #{tpu_custom_call.1} parent=47 // pred_fallthru
          _
        %v348 = vld [vmem:[%s327] sm:$0xff]
        %v349 = vpack.c.bf16 %v348, %v348
        %v350 = vld [vmem:[%s331] sm:$0xf]
        %v351 = vld [vmem:[%s331 + $0x4] sm:$0xf]
        %v352 = vld [vmem:[%s331 + $0x8] sm:$0xf]
        %v353 = vld [vmem:[%s331 + $0xc] sm:$0xf]
        %v354 = vld [vmem:[%s334] sm:$0x1]
        %v356 = vlaneseq
        %v357 = vshrl.u32 %v356, 7
        %v358 = vsub.s32 0, %v357
        %v359 = vrot.slane %v354, %v358
        %v365 = vunpack.c.l.b16 %v350
        %v366 = vunpack.c.l.b16 %v351
        %v367 = vunpack.c.l.b16 %v352
        %v368 = vunpack.c.l.b16 %v353
        %v369 = vpack.c.b16 %v366, %v365
        %v370 = vpack.c.b16 %v368, %v367
        %vm373 = vcmask 261120
        %v375 = vsel %vm373, %v349, 0
        %377 = vmatprep.subr.bf16.mxu0 0
        %378 = vmatpush1.bf16.msra.mxu0 %v369
        %379 = vmatprep.subr.bf16.mxu0 0
        %380 = vmatpush1.bf16.msra.mxu0 %v370
        %381 = vmatprep.subr.bf16.mxu0 0
        %382 = vmatpush1.bf16.msra.mxu0 0
        %383 = vmatprep.subr.bf16.mxu0 0
        %384 = vmatpush1.bf16.msra.mxu0 0
        %385 = vmatprep.subr.bf16.mxu0 0
        %386 = vmatpush1.bf16.msra.mxu0 0
        %387 = vmatprep.subr.bf16.mxu0 0
        %388 = vmatpush1.bf16.msra.mxu0 0
        %389 = vmatprep.subr.bf16.mxu0 0
        %390 = vmatpush1.bf16.msra.mxu0 0
        %391 = vmatprep.subr.bf16.mxu0 0
        %392 = vmatpush1.bf16.msra.mxu0 0
        %393 = vmatprep.subr.bf16.mxu0 0
        %394 = vmatpush1.bf16.msra.mxu0 0
        %395 = vmatprep.subr.bf16.mxu0 0
        %396 = vmatpush1.bf16.msra.mxu0 0
        %397 = vmatprep.subr.bf16.mxu0 0
        %398 = vmatpush1.bf16.msra.mxu0 0
        %399 = vmatprep.subr.bf16.mxu0 0
        %400 = vmatpush1.bf16.msra.mxu0 0
        %401 = vmatprep.subr.bf16.mxu0 0
        %402 = vmatpush1.bf16.msra.mxu0 0
        %403 = vmatprep.subr.bf16.mxu0 0
        %404 = vmatpush1.bf16.msra.mxu0 0
        %405 = vmatprep.subr.bf16.mxu0 0
        %406 = vmatpush1.bf16.msra.mxu0 0
        %407 = vmatprep.subr.bf16.mxu0 0
        %408 = vmatpush1.bf16.msra.mxu0 0
        %409 = vmatprep.mubr.bf16.mxu0 0
        %410 = vmatmul.mubr.bf16.gmra.mrb[0].mxu0 %v375
        %v411 = vpop.f32.mrb[0].mxu0
        %v412 = vadd.f32 %v359, %v411
        %v413 = vpop.f32.mrb[0].mxu0
        %v414 = vpop.f32.mrb[0].mxu0
        %v415 = vpop.f32.mrb[0].mxu0
        %416 = vdwg.mxu0
        %v417 = vmul.f32 %v412, %v412
        %v418 = vmul.f32 %v417, 0.035677407
        %v419 = vadd.f32 %v418, 0.7978846
        %v420 = vmul.f32 %v412, %v419
        %v421 = vtanh.pop %v420
        %v422 = vmul.f32 %v421, 0.5
        %v423 = vadd.f32 %v422, 0.5
        %v424 = vmul.f32 %v412, %v423
        %v425 = vld [vmem:[#allocation2] sm:$0xff]
        %v426 = vpack.c.bf16 %v424, %v424
        %v427 = vld [vmem:[%s339] sm:$0xf]
        %v428 = vld [vmem:[%s339 + $0x4] sm:$0xf]
        %v429 = vld [vmem:[%s339 + $0x8] sm:$0xf]
        %v430 = vld [vmem:[%s339 + $0xc] sm:$0xf]
        %v431 = vld [vmem:[%s339 + $0x10] sm:$0xf]
        %v432 = vld [vmem:[%s339 + $0x14] sm:$0xf]
        %v433 = vld [vmem:[%s339 + $0x18] sm:$0xf]
        %v434 = vld [vmem:[%s339 + $0x1c] sm:$0xf]
        %v435 = vld [vmem:[%s339 + $0x20] sm:$0xf]
        %v436 = vld [vmem:[%s339 + $0x24] sm:$0xf]
        %v437 = vld [vmem:[%s339 + $0x28] sm:$0xf]
        %v438 = vld [vmem:[%s339 + $0x2c] sm:$0xf]
        %v439 = vld [vmem:[%s339 + $0x30] sm:$0xf]
        %v440 = vld [vmem:[%s339 + $0x34] sm:$0xf]
        %v441 = vld [vmem:[%s339 + $0x38] sm:$0xf]
        %v442 = vld [vmem:[%s339 + $0x3c] sm:$0xf]
        %v459 = vunpack.c.l.b16 %v427
        %v460 = vunpack.c.l.b16 %v428
        %v461 = vunpack.c.l.b16 %v429
        %v462 = vunpack.c.l.b16 %v430
        %v463 = vunpack.c.l.b16 %v431
        %v464 = vunpack.c.l.b16 %v432
        %v465 = vunpack.c.l.b16 %v433
        %v466 = vunpack.c.l.b16 %v434
        %v467 = vunpack.c.l.b16 %v435
        %v468 = vunpack.c.l.b16 %v436
        %v469 = vunpack.c.l.b16 %v437
        %v470 = vunpack.c.l.b16 %v438
        %v471 = vunpack.c.l.b16 %v439
        %v472 = vunpack.c.l.b16 %v440
        %v473 = vunpack.c.l.b16 %v441
        %v474 = vunpack.c.l.b16 %v442
        %v475 = vpack.c.b16 %v460, %v459
        %v476 = vpack.c.b16 %v462, %v461
        %v477 = vpack.c.b16 %v464, %v463
        %v478 = vpack.c.b16 %v466, %v465
        %v479 = vpack.c.b16 %v468, %v467
        %v480 = vpack.c.b16 %v470, %v469
        %v481 = vpack.c.b16 %v472, %v471
        %v482 = vpack.c.b16 %v474, %v473
        %491 = vmatprep.subr.bf16.mxu0 0
        %492 = vmatpush1.bf16.msra.mxu0 %v475
        %493 = vmatprep.subr.bf16.mxu0 0
        %494 = vmatpush1.bf16.msra.mxu0 %v476
        %495 = vmatprep.subr.bf16.mxu0 0
        %496 = vmatpush1.bf16.msra.mxu0 %v477
        %497 = vmatprep.subr.bf16.mxu0 0
        %498 = vmatpush1.bf16.msra.mxu0 %v478
        %499 = vmatprep.subr.bf16.mxu0 0
        %500 = vmatpush1.bf16.msra.mxu0 %v479
        %501 = vmatprep.subr.bf16.mxu0 0
        %502 = vmatpush1.bf16.msra.mxu0 %v480
        %503 = vmatprep.subr.bf16.mxu0 0
        %504 = vmatpush1.bf16.msra.mxu0 %v481
        %505 = vmatprep.subr.bf16.mxu0 0
        %506 = vmatpush1.bf16.msra.mxu0 %v482
        %507 = vmatprep.subr.bf16.mxu0 0
        %508 = vmatpush1.bf16.msra.mxu0 0
        %509 = vmatprep.subr.bf16.mxu0 0
        %510 = vmatpush1.bf16.msra.mxu0 0
        %511 = vmatprep.subr.bf16.mxu0 0
        %512 = vmatpush1.bf16.msra.mxu0 0
        %513 = vmatprep.subr.bf16.mxu0 0
        %514 = vmatpush1.bf16.msra.mxu0 0
        %515 = vmatprep.subr.bf16.mxu0 0
        %516 = vmatpush1.bf16.msra.mxu0 0
        %517 = vmatprep.subr.bf16.mxu0 0
        %518 = vmatpush1.bf16.msra.mxu0 0
        %519 = vmatprep.subr.bf16.mxu0 0
        %520 = vmatpush1.bf16.msra.mxu0 0
        %521 = vmatprep.subr.bf16.mxu0 0
        %522 = vmatpush1.bf16.msra.mxu0 0
        %523 = vmatprep.mubr.bf16.mxu0 0
        %524 = vmatmul.mubr.bf16.gmra.mrb[0].mxu0 %v426
        %v525 = vpop.f32.mrb[0].mxu0
        %v526 = vadd.f32 0.0, %v525
        %v527 = vpop.f32.mrb[0].mxu0
        %v528 = vpop.f32.mrb[0].mxu0
        %v529 = vpop.f32.mrb[0].mxu0
        %530 = vdwg.mxu0
        %v531 = vadd.f32 %v425, %v526
        %532 = vst.msk [vmem:[#allocation2] sm:$0xff] %vm373, %v531
        // Predicated region
        $region53: #{tpu_custom_call.1} parent=47 // pred_check
          %p533 = pneg %p342
        $region54: #{tpu_custom_call.1} parent=47 // pred_check_branch
          %535 = sbr.rel (%p533) target = $region56
        $region55: #{tpu_custom_call.1} parent=47 // pred_region
          %v536 = vld [vmem:[#allocation2] sm:$0xff]
          %v537 = vld [vmem:[%s6] sm:$0x1]
          %v539 = vlaneseq
          %v540 = vshrl.u32 %v539, 7
          %v541 = vsub.s32 0, %v540
          %v542 = vrot.slane %v537, %v541
          %v544 = vadd.f32 %v536, %v542
          %v545 = vadd.f32 %v544, %v348
          %v546 = vsel %vm373, %v545, 0.0
          %547 = vadd.xlane.f32.xlu0 %v546
          %v548 = vpop.xlane.xlu0 %547
          %v549 = vmul.f32 %v545, %v545
          %v550 = vsel %vm373, %v549, 0.0
          %551 = vadd.xlane.f32.xlu0 %v550
          %v552 = vpop.xlane.xlu0 %551
          %v553 = vmul.f32 %v548, 0.03125
          %v554 = vmul.f32 %v548, %v553
          %v555 = vsub.f32 %v552, %v554
          %v556 = vmul.f32 %v555, 0.032258064
          %v557 = vsub.f32 %v545, %v553
          %v558 = vadd.f32 %v556, 1e-08
          %v559 = vrsqrt.pop %v558
          %v560 = vmul.f32 %v557, %v559
          %s561 = sld [smem:[#allocation3]]
          %v562 = vstv %s561
          %v563 = vmul.f32 %v562, %v560
          %s564 = sld [smem:[#allocation4]]
          %v565 = vstv %s564
          %v566 = vadd.f32 %v563, %v565
          %567 = vst.msk [vmem:[%s323] sm:$0xff] %vm373, %v566
        $region56: #{tpu_custom_call.1} parent=47 // pred_fallthru
          _
        %s568 = sand.u32 %s210, 1
        %s569 = scalar_lea.sflag [#allocation6], %s568
        %s570 = sand.u32 %s210, 1
        %s571 = smul.addr %s570, 8
        %s572 = scalar_lea.vmem [#allocation5], %s571
        // Predicated region
        $region57: #{tpu_custom_call.1} parent=47 // pred_check
          %p573 = pneg %p220
        $region58: #{tpu_custom_call.1} parent=47 // pred_check_branch
          %575 = sbr.rel (%p573) target = $region60
        $region59: #{tpu_custom_call.1} parent=47 // pred_region
          %s577 = ssub.s32 128, 128
          %578 = vsyncadd %s569, %s577
          %s579 = smul.addr %s27, 128
          %s580 = scalar_lea.hbm %s7, %s579
          %s582 = sshll.u32 %s572, 4
          %s583 = int_to_ptr.vmem [resolvable:$true] %s582
          %585 = dma.vmem_to_hbm [thread:$0]  %s583, 128, %s580, %s569
        $region60: #{tpu_custom_call.1} parent=47 // pred_fallthru
          _
      $region48: #{tpu_custom_call.1} parent=5 // pred_fallthru
        _
      %p586 = scmp.le.s32.totalorder 2, %s18
      // Predicated region
      $region61: #{tpu_custom_call.1} parent=5 // pred_check
        %p587 = pneg %p586
      $region62: #{tpu_custom_call.1} parent=5 // pred_check_branch
        %589 = sbr.rel (%p587) target = $region64
      $region63: #{tpu_custom_call.1} parent=5 // pred_region
        %s590 = ssub.s32 %s18, 2
        // Predicated region
        $region65: #{tpu_custom_call.1} parent=63 // pred_check
          %p591 = pneg %p226
        $region66: #{tpu_custom_call.1} parent=63 // pred_check_branch
          %593 = sbr.rel (%p591) target = $region68
        $region67: #{tpu_custom_call.1} parent=63 // pred_region
          %s594 = sand.u32 %s211, 1
          %s595 = scalar_lea.sflag [#allocation6], %s594
          %s596 = sand.u32 %s211, 1
          %s597 = smul.addr %s596, 8
          %s598 = scalar_lea.vmem [#allocation5], %s597
          %599 = dma.done %s595, 128
        $region68: #{tpu_custom_call.1} parent=63 // pred_fallthru
          _
      $region64: #{tpu_custom_call.1} parent=5 // pred_fallthru
        _
    $region6: #{tpu_custom_call.1} parent=1 // loop_footer
      %s22 = sadd.s32 1, %s18
    $region7: #{tpu_custom_call.1} parent=1 // loop_footer_branch
      %17 = sbr.rel target = $region3
    $region8: #{tpu_custom_call.1} parent=1 // loop_exit
      _
    %600 = vsyncpa [#allocation6], 1
    %s601 = scalar_lea.sflag [#allocation6], 1
    %602 = vsyncpa %s601, 1

</llo_original>
